<compile_context>
chip_gen: v5e
topology: v5e:2x2
jax: 0.10.0
libtpu: 0.0.40
codegen_flags: <defaults>
</compile_context>

<pallas_src>
import functools

import jax
import jax.numpy as jnp
from jax.experimental import pallas as pl
from jax.experimental.pallas import tpu as pltpu

LEAKY_SLOPE = 0.01  # F.leaky_relu default negative_slope
BN_EPS = 1e-5


# ---------------------------------------------------------------------------
# Fused kernel: BN (eval) + leaky_relu + 2x2x2 average pool + 1x1x1 conv
# ---------------------------------------------------------------------------
def _transition_kernel(x_ref, scale_ref, shift_ref, w_ref, o_ref, *, c_in):
    # x_ref:     (TM, 8*C_in) bf16/f32, each row = one output voxel's 2x2x2 window
    # scale_ref: (1, C_in)    f32, gamma * rsqrt(var + eps)
    # shift_ref: (1, C_in)    f32, beta - mean * scale
    # w_ref:     (C_in, C_out) 1x1x1 conv weight (transposed) with 1/8 pool folded in
    # o_ref:     (TM, C_out)  f32
    scale = scale_ref[...]
    shift = shift_ref[...]
    acc = None
    # Incremental accumulation over the 8 window taps: never materializes the full
    # (TM, 8*C_in) post-BN tensor (8x smaller temporaries than the naive form).
    for p in range(8):
        xp = x_ref[:, p * c_in:(p + 1) * c_in].astype(jnp.float32)
        yp = xp * scale + shift                        # BatchNorm3d (running stats)
        yp = jnp.where(yp > 0, yp, LEAKY_SLOPE * yp)   # leaky_relu
        acc = yp if acc is None else acc + yp
    # Pool and 1x1x1 conv commute; the 1/8 mean factor is folded into w_ref.
    o_ref[...] = jnp.dot(
        acc.astype(w_ref.dtype), w_ref[...], preferred_element_type=jnp.float32
    ).astype(o_ref.dtype)


def _choose_tile_m(m_out, c_in, c_out, in_itemsize, *,
                   vmem_budget_bytes=20 * 1024 * 1024, min_grid_steps=8):
    """Pick the row tile.  Accounts for everything resident (double-buffered input
    and output blocks, f32 accumulator + one upcast slice, weights), capped at 2048
    rows, multiple of 8.  Prefers a divisor of m_out (no pad pass over the big
    gathered tensor) and keeps >= min_grid_steps grid steps so the 1-D 'parallel'
    grid splits evenly across v7x's two TensorCores.  Returns (tile_m, need_pad)."""
    per_row = (2 * 8 * c_in * in_itemsize   # double-buffered gathered input block
               + 2 * c_out * 4              # double-buffered f32 output block
               + 3 * c_in * 4)              # f32 accumulator + one upcast slice temp
    fixed = 2 * c_in * c_out * 4 + 4 * c_in * 4   # weights + scale/shift (generous)
    cap = (vmem_budget_bytes - fixed) // max(per_row, 1)
    cap = max(8, min(2048, (cap // 8) * 8))
    if m_out <= 8:
        return max(m_out, 1), False          # single full block (== array dim)
    if m_out >= 8 * min_grid_steps:
        cap = min(cap, max(8, ((m_out // min_grid_steps) // 8) * 8))
    start = min(cap, (m_out // 8) * 8)
    for t in range(start, 7, -8):             # largest multiple-of-8 divisor <= cap
        if m_out % t == 0:
            return t, False
    # No clean divisor: fall back to a multiple-of-8 tile + zero-padded rows.
    return min(cap, ((m_out + 7) // 8) * 8), True


# ---------------------------------------------------------------------------
# Full forward pass (layout glue in XLA, all math in one Pallas kernel)
# ---------------------------------------------------------------------------
def transitions_forward(x_ncdhw, params, *, tile_m=None, stream_dtype=jnp.bfloat16):
    """x_ncdhw: (N, C_in, D, H, W) float32 -> (N, C_out, D//2, H//2, W//2) float32."""
    gamma = params["gamma"].astype(jnp.float32)
    beta = params["beta"].astype(jnp.float32)
    run_mean = params["running_mean"].astype(jnp.float32)
    run_var = params["running_var"].astype(jnp.float32)
    conv_w = params["conv_w"].astype(jnp.float32)

    n, c_in, d, h, w = x_ncdhw.shape
    assert d % 2 == 0 and h % 2 == 0 and w % 2 == 0, "avg_pool3d(2) needs even D/H/W"
    c_out = conv_w.shape[0]
    do, ho, wo = d // 2, h // 2, w // 2
    m_out = n * do * ho * wo
    k_lanes = 8 * c_in

    # Fold BN into per-channel scale/shift (kept f32, un-tiled).
    inv_std = jax.lax.rsqrt(run_var + BN_EPS)
    scale = (gamma * inv_std).reshape(1, c_in)
    shift = (beta - run_mean * gamma * inv_std).reshape(1, c_in)
    # 1x1x1 conv weight: (C_out, C_in, 1, 1, 1) -> (C_in, C_out); 1/8 pool folded in.
    w_mat = (conv_w.reshape(c_out, c_in).T * 0.125).astype(stream_dtype)

    # ONE XLA pass (in the bf16 stream dtype -> half the bytes moved) does both the
    # channels-last move and the 2x2x2 window gather:
    # (N,C,D,H,W) -> (N,C,Do,2,Ho,2,Wo,2) -> (N,Do,Ho,Wo,2,2,2,C) -> (M_out, 8*C)
    # TODO(synk): if the surrounding model keeps activations NDHWC (channels-last),
    # this transpose can be dropped and the window gather expressed with 8 BlockSpecs.
    xw = x_ncdhw.astype(stream_dtype).reshape(n, c_in, do, 2, ho, 2, wo, 2)
    xw = jnp.transpose(xw, (0, 2, 4, 6, 3, 5, 7, 1)).reshape(m_out, k_lanes)

    if tile_m is None:
        tile_m, need_pad = _choose_tile_m(
            m_out, c_in, c_out, jnp.dtype(stream_dtype).itemsize)
    else:
        need_pad = (m_out % tile_m) != 0
    m_pad = pl.cdiv(m_out, tile_m) * tile_m
    if need_pad and m_pad != m_out:
        xw = jnp.pad(xw, ((0, m_pad - m_out), (0, 0)))  # zero rows, sliced off below

    out_flat = pl.pallas_call(
        functools.partial(_transition_kernel, c_in=c_in),
        out_shape=jax.ShapeDtypeStruct((m_pad, c_out), jnp.float32),
        grid_spec=pltpu.PrefetchScalarGridSpec(
            num_scalar_prefetch=0,
            grid=(m_pad // tile_m,),
            in_specs=[
                pl.BlockSpec((tile_m, k_lanes), lambda i: (i, 0)),
                pl.BlockSpec((1, c_in), lambda i: (0, 0)),
                pl.BlockSpec((1, c_in), lambda i: (0, 0)),
                pl.BlockSpec((c_in, c_out), lambda i: (0, 0)),
            ],
            # With real DenseNet widths (C_out >= 128) this store is lane-dense;
            # for the toy C_out it is masked but output traffic is negligible.
            out_specs=pl.BlockSpec((tile_m, c_out), lambda i: (i, 0)),
        ),
        compiler_params=pltpu.CompilerParams(
            dimension_semantics=("parallel",),
            vmem_limit_bytes=48 * 1024 * 1024,  # <= v7x's 64 MiB/core; fine on v5e/v6e
        ),
    )(xw, scale, shift, w_mat)

    out = out_flat[:m_out].reshape(n, do, ho, wo, c_out)
    return jnp.transpose(out, (0, 4, 1, 2, 3))  # back to NCDHW


# ---------------------------------------------------------------------------
# Params + plain-JAX reference (conv-then-pool, exactly as the PyTorch module)
# ---------------------------------------------------------------------------
def init_params(key, in_channels, out_channels):
    k1, k2, k3, k4 = jax.random.split(key, 4)
    return {
        "gamma": 1.0 + 0.1 * jax.random.normal(k1, (in_channels,), jnp.float32),
        "beta": 0.1 * jax.random.normal(k2, (in_channels,), jnp.float32),
        "running_mean": 0.1 * jax.random.normal(k3, (in_channels,), jnp.float32),
        "running_var": jnp.abs(1.0 + 0.1 * jax.random.normal(k4, (in_channels,), jnp.float32)),
        "conv_w": jax.random.normal(
            jax.random.fold_in(key, 7), (out_channels, in_channels, 1, 1, 1), jnp.float32
        ) * (1.0 / jnp.sqrt(in_channels)),
    }


def reference_forward(x, params):
    gamma, beta, mean, var, conv_w = (
        params["gamma"], params["beta"], params["running_mean"],
        params["running_var"], params["conv_w"],
    )
    c_out, c_in = conv_w.shape[0], conv_w.shape[1]
    xn = (x - mean[None, :, None, None, None]) / jnp.sqrt(var + BN_EPS)[None, :, None, None, None]
    xn = xn * gamma[None, :, None, None, None] + beta[None, :, None, None, None]
    xn = jnp.where(xn > 0, xn, LEAKY_SLOPE * xn)
    y = jnp.einsum("ncdhw,oc->nodhw", xn, conv_w.reshape(c_out, c_in))
    n, co, d, h, w = y.shape
    y = y.reshape(n, co, d // 2, 2, h // 2, 2, w // 2, 2).mean(axis=(3, 5, 7))
    return y


if __name__ == "__main__":
    N, C_IN, C_OUT, D, H, W = 2, 8, 4, 8, 8, 8
    key = jax.random.PRNGKey(0)
    kx, kp = jax.random.split(key)
    x = jax.random.normal(kx, (N, C_IN, D, H, W), jnp.float32)
    params = init_params(kp, C_IN, C_OUT)

    fwd = jax.jit(transitions_forward, static_argnames=("tile_m", "stream_dtype"))
    ref = jax.block_until_ready(reference_forward(x, params))

    # Exactness check with an f32 stream (matches the f32 reference tightly).
    out_f32 = jax.block_until_ready(fwd(x, params, stream_dtype=jnp.float32))
    assert out_f32.shape == (N, C_OUT, D // 2, H // 2, W // 2), out_f32.shape
    assert jnp.allclose(out_f32, ref, atol=1e-4, rtol=1e-4), float(jnp.max(jnp.abs(out_f32 - ref)))

    # Default fast path: bf16 activation/weight streaming (looser tolerance vs f32 ref).
    out = jax.block_until_ready(fwd(x, params))
    assert out.shape == (N, C_OUT, D // 2, H // 2, W // 2), out.shape
    assert jnp.allclose(out, ref, atol=5e-2, rtol=5e-2), float(jnp.max(jnp.abs(out - ref)))

    print("KERNEL_OK")
</pallas_src>

<mosaic_0001>
module attributes {stable_mosaic.version = 11 : i64} {
  func.func @_transition_kernel(%arg0: i32, %arg1: memref<16x64xf32, #tpu.memory_space<vmem>>, %arg2: memref<1x8xf32, #tpu.memory_space<vmem>>, %arg3: memref<1x8xf32, #tpu.memory_space<vmem>>, %arg4: memref<8x4xf32, #tpu.memory_space<vmem>>, %arg5: memref<16x4xf32, #tpu.memory_space<vmem>>) attributes {dimension_semantics = [#tpu.dimension_semantics<parallel>], iteration_bounds = array<i64: 8>, scalar_prefetch = 0 : i64, scratch_operands = 0 : i64, tpu.core_type = #tpu.core_type<tc>, window_params = [{transform_indices = @transform_0, window_bounds = array<i64: 16, 64>}, {pipeline_mode = #tpu.pipeline_mode<synchronous>, transform_indices = @transform_1, window_bounds = array<i64: 1, 8>}, {pipeline_mode = #tpu.pipeline_mode<synchronous>, transform_indices = @transform_2, window_bounds = array<i64: 1, 8>}, {pipeline_mode = #tpu.pipeline_mode<synchronous>, transform_indices = @transform_3, window_bounds = array<i64: 8, 4>}, {transform_indices = @transform_4, window_bounds = array<i64: 16, 4>}]} {
    %c0 = arith.constant 0 : index
    %c0_0 = arith.constant 0 : index
    %0 = vector.load %arg2[%c0, %c0_0] : memref<1x8xf32, #tpu.memory_space<vmem>>, vector<1x8xf32>
    %c0_1 = arith.constant 0 : index
    %c0_2 = arith.constant 0 : index
    %1 = vector.load %arg3[%c0_1, %c0_2] : memref<1x8xf32, #tpu.memory_space<vmem>>, vector<1x8xf32>
    %c0_3 = arith.constant 0 : index
    %c0_4 = arith.constant 0 : index
    %2 = vector.load %arg1[%c0_3, %c0_4] : memref<16x64xf32, #tpu.memory_space<vmem>>, vector<16x8xf32>
    %3 = vector.broadcast %0 : vector<1x8xf32> to vector<16x8xf32>
    %4 = arith.mulf %2, %3 : vector<16x8xf32>
    %5 = vector.broadcast %1 : vector<1x8xf32> to vector<16x8xf32>
    %6 = arith.addf %4, %5 : vector<16x8xf32>
    %cst = arith.constant 0.000000e+00 : f32
    %7 = vector.broadcast %cst : f32 to vector<16x8xf32>
    %8 = arith.cmpf ogt, %6, %7 : vector<16x8xf32>
    %cst_5 = arith.constant 0.00999999977 : f32
    %9 = vector.broadcast %cst_5 : f32 to vector<16x8xf32>
    %10 = arith.mulf %9, %6 : vector<16x8xf32>
    %11 = arith.select %8, %6, %10 : vector<16x8xi1>, vector<16x8xf32>
    %c0_6 = arith.constant 0 : index
    %c8 = arith.constant 8 : index
    %12 = vector.load %arg1[%c0_6, %c8] : memref<16x64xf32, #tpu.memory_space<vmem>>, vector<16x8xf32>
    %13 = vector.broadcast %0 : vector<1x8xf32> to vector<16x8xf32>
    %14 = arith.mulf %12, %13 : vector<16x8xf32>
    %15 = vector.broadcast %1 : vector<1x8xf32> to vector<16x8xf32>
    %16 = arith.addf %14, %15 : vector<16x8xf32>
    %cst_7 = arith.constant 0.000000e+00 : f32
    %17 = vector.broadcast %cst_7 : f32 to vector<16x8xf32>
    %18 = arith.cmpf ogt, %16, %17 : vector<16x8xf32>
    %cst_8 = arith.constant 0.00999999977 : f32
    %19 = vector.broadcast %cst_8 : f32 to vector<16x8xf32>
    %20 = arith.mulf %19, %16 : vector<16x8xf32>
    %21 = arith.select %18, %16, %20 : vector<16x8xi1>, vector<16x8xf32>
    %22 = arith.addf %11, %21 : vector<16x8xf32>
    %c0_9 = arith.constant 0 : index
    %c16 = arith.constant 16 : index
    %23 = vector.load %arg1[%c0_9, %c16] : memref<16x64xf32, #tpu.memory_space<vmem>>, vector<16x8xf32>
    %24 = vector.broadcast %0 : vector<1x8xf32> to vector<16x8xf32>
    %25 = arith.mulf %23, %24 : vector<16x8xf32>
    %26 = vector.broadcast %1 : vector<1x8xf32> to vector<16x8xf32>
    %27 = arith.addf %25, %26 : vector<16x8xf32>
    %cst_10 = arith.constant 0.000000e+00 : f32
    %28 = vector.broadcast %cst_10 : f32 to vector<16x8xf32>
    %29 = arith.cmpf ogt, %27, %28 : vector<16x8xf32>
    %cst_11 = arith.constant 0.00999999977 : f32
    %30 = vector.broadcast %cst_11 : f32 to vector<16x8xf32>
    %31 = arith.mulf %30, %27 : vector<16x8xf32>
    %32 = arith.select %29, %27, %31 : vector<16x8xi1>, vector<16x8xf32>
    %33 = arith.addf %22, %32 : vector<16x8xf32>
    %c0_12 = arith.constant 0 : index
    %c24 = arith.constant 24 : index
    %34 = vector.load %arg1[%c0_12, %c24] : memref<16x64xf32, #tpu.memory_space<vmem>>, vector<16x8xf32>
    %35 = vector.broadcast %0 : vector<1x8xf32> to vector<16x8xf32>
    %36 = arith.mulf %34, %35 : vector<16x8xf32>
    %37 = vector.broadcast %1 : vector<1x8xf32> to vector<16x8xf32>
    %38 = arith.addf %36, %37 : vector<16x8xf32>
    %cst_13 = arith.constant 0.000000e+00 : f32
    %39 = vector.broadcast %cst_13 : f32 to vector<16x8xf32>
    %40 = arith.cmpf ogt, %38, %39 : vector<16x8xf32>
    %cst_14 = arith.constant 0.00999999977 : f32
    %41 = vector.broadcast %cst_14 : f32 to vector<16x8xf32>
    %42 = arith.mulf %41, %38 : vector<16x8xf32>
    %43 = arith.select %40, %38, %42 : vector<16x8xi1>, vector<16x8xf32>
    %44 = arith.addf %33, %43 : vector<16x8xf32>
    %c0_15 = arith.constant 0 : index
    %c32 = arith.constant 32 : index
    %45 = vector.load %arg1[%c0_15, %c32] : memref<16x64xf32, #tpu.memory_space<vmem>>, vector<16x8xf32>
    %46 = vector.broadcast %0 : vector<1x8xf32> to vector<16x8xf32>
    %47 = arith.mulf %45, %46 : vector<16x8xf32>
    %48 = vector.broadcast %1 : vector<1x8xf32> to vector<16x8xf32>
    %49 = arith.addf %47, %48 : vector<16x8xf32>
    %cst_16 = arith.constant 0.000000e+00 : f32
    %50 = vector.broadcast %cst_16 : f32 to vector<16x8xf32>
    %51 = arith.cmpf ogt, %49, %50 : vector<16x8xf32>
    %cst_17 = arith.constant 0.00999999977 : f32
    %52 = vector.broadcast %cst_17 : f32 to vector<16x8xf32>
    %53 = arith.mulf %52, %49 : vector<16x8xf32>
    %54 = arith.select %51, %49, %53 : vector<16x8xi1>, vector<16x8xf32>
    %55 = arith.addf %44, %54 : vector<16x8xf32>
    %c0_18 = arith.constant 0 : index
    %c40 = arith.constant 40 : index
    %56 = vector.load %arg1[%c0_18, %c40] : memref<16x64xf32, #tpu.memory_space<vmem>>, vector<16x8xf32>
    %57 = vector.broadcast %0 : vector<1x8xf32> to vector<16x8xf32>
    %58 = arith.mulf %56, %57 : vector<16x8xf32>
    %59 = vector.broadcast %1 : vector<1x8xf32> to vector<16x8xf32>
    %60 = arith.addf %58, %59 : vector<16x8xf32>
    %cst_19 = arith.constant 0.000000e+00 : f32
    %61 = vector.broadcast %cst_19 : f32 to vector<16x8xf32>
    %62 = arith.cmpf ogt, %60, %61 : vector<16x8xf32>
    %cst_20 = arith.constant 0.00999999977 : f32
    %63 = vector.broadcast %cst_20 : f32 to vector<16x8xf32>
    %64 = arith.mulf %63, %60 : vector<16x8xf32>
    %65 = arith.select %62, %60, %64 : vector<16x8xi1>, vector<16x8xf32>
    %66 = arith.addf %55, %65 : vector<16x8xf32>
    %c0_21 = arith.constant 0 : index
    %c48 = arith.constant 48 : index
    %67 = vector.load %arg1[%c0_21, %c48] : memref<16x64xf32, #tpu.memory_space<vmem>>, vector<16x8xf32>
    %68 = vector.broadcast %0 : vector<1x8xf32> to vector<16x8xf32>
    %69 = arith.mulf %67, %68 : vector<16x8xf32>
    %70 = vector.broadcast %1 : vector<1x8xf32> to vector<16x8xf32>
    %71 = arith.addf %69, %70 : vector<16x8xf32>
    %cst_22 = arith.constant 0.000000e+00 : f32
    %72 = vector.broadcast %cst_22 : f32 to vector<16x8xf32>
    %73 = arith.cmpf ogt, %71, %72 : vector<16x8xf32>
    %cst_23 = arith.constant 0.00999999977 : f32
    %74 = vector.broadcast %cst_23 : f32 to vector<16x8xf32>
    %75 = arith.mulf %74, %71 : vector<16x8xf32>
    %76 = arith.select %73, %71, %75 : vector<16x8xi1>, vector<16x8xf32>
    %77 = arith.addf %66, %76 : vector<16x8xf32>
    %c0_24 = arith.constant 0 : index
    %c56 = arith.constant 56 : index
    %78 = vector.load %arg1[%c0_24, %c56] : memref<16x64xf32, #tpu.memory_space<vmem>>, vector<16x8xf32>
    %79 = vector.broadcast %0 : vector<1x8xf32> to vector<16x8xf32>
    %80 = arith.mulf %78, %79 : vector<16x8xf32>
    %81 = vector.broadcast %1 : vector<1x8xf32> to vector<16x8xf32>
    %82 = arith.addf %80, %81 : vector<16x8xf32>
    %cst_25 = arith.constant 0.000000e+00 : f32
    %83 = vector.broadcast %cst_25 : f32 to vector<16x8xf32>
    %84 = arith.cmpf ogt, %82, %83 : vector<16x8xf32>
    %cst_26 = arith.constant 0.00999999977 : f32
    %85 = vector.broadcast %cst_26 : f32 to vector<16x8xf32>
    %86 = arith.mulf %85, %82 : vector<16x8xf32>
    %87 = arith.select %84, %82, %86 : vector<16x8xi1>, vector<16x8xf32>
    %88 = arith.addf %77, %87 : vector<16x8xf32>
    %c0_27 = arith.constant 0 : index
    %c0_28 = arith.constant 0 : index
    %89 = vector.load %arg4[%c0_27, %c0_28] : memref<8x4xf32, #tpu.memory_space<vmem>>, vector<8x4xf32>
    %cst_29 = arith.constant dense<0.000000e+00> : vector<16x4xf32>
    %90 = tpu.matmul %88, %89, %cst_29 {dimension_numbers = #tpu.dot_dimension_numbers<[1], [0], [0], [1], [0, 0, 1, 1], [], []>} : vector<16x8xf32>, vector<8x4xf32>, vector<16x4xf32> -> vector<16x4xf32>
    %c0_30 = arith.constant 0 : index
    %c0_31 = arith.constant 0 : index
    %91 = vector.load %arg5[%c0_30, %c0_31] : memref<16x4xf32, #tpu.memory_space<vmem>>, vector<16x4xf32>
    tpu.vector_store %arg5[%c0_30, %c0_31], %90 {strides = array<i32>} : memref<16x4xf32, #tpu.memory_space<vmem>>, vector<16x4xf32>,
    return
  }
  func.func @transform_0(%arg0: i32) -> (i32, i32) {
    %c0_i32 = arith.constant 0 : i32
    %c0_i32_0 = arith.constant 0 : i32
    return %arg0, %c0_i32 : i32, i32
  }
  func.func @transform_1(%arg0: i32) -> (i32, i32) {
    %c0_i32 = arith.constant 0 : i32
    %c0_i32_0 = arith.constant 0 : i32
    %c0_i32_1 = arith.constant 0 : i32
    return %c0_i32, %c0_i32_0 : i32, i32
  }
  func.func @transform_2(%arg0: i32) -> (i32, i32) {
    %c0_i32 = arith.constant 0 : i32
    %c0_i32_0 = arith.constant 0 : i32
    %c0_i32_1 = arith.constant 0 : i32
    return %c0_i32, %c0_i32_0 : i32, i32
  }
  func.func @transform_3(%arg0: i32) -> (i32, i32) {
    %c0_i32 = arith.constant 0 : i32
    %c0_i32_0 = arith.constant 0 : i32
    %c0_i32_1 = arith.constant 0 : i32
    return %c0_i32, %c0_i32_0 : i32, i32
  }
  func.func @transform_4(%arg0: i32) -> (i32, i32) {
    %c0_i32 = arith.constant 0 : i32
    %c0_i32_0 = arith.constant 0 : i32
    return %arg0, %c0_i32 : i32, i32
  }
}

</mosaic_0001>

<llo_original>
// kernel: transitions_forward.1
$region0: #{transitions_forward.1}
  #allocation0 [shape = 'u32[]', space=smem, size = 0x4, offset = 0x4, fixed_abs, tag = 'smem constant byte address 0x4 - core index']
  #allocation1 [shape = 'u32[72,128]{1,0:T(1,128)}', space=vmem, size = 0x9000, scoped, tag = 'internal scratch']
  %s0 = inlined_call_operand.vmem [shape: f32[128,64], index: 0, kind: input, shape index: {}]
  %s1 = inlined_call_operand.vmem [shape: f32[1,8], index: 1, kind: input, shape index: {}]
  %s2 = inlined_call_operand.vmem [shape: f32[1,8], index: 2, kind: input, shape index: {}]
  %s3 = inlined_call_operand.vmem [shape: f32[8,4], index: 3, kind: input, shape index: {}]
  %s4 = inlined_call_operand.vmem [shape: f32[128,4], index: 4, kind: output, shape index: {}]
  %s5 = sld [smem:[#allocation0]]
  $region49: #{transitions_forward.1} parent=0
    _
  %s7 = ssub.s32 1, %s5
  %s8 = scalar_select 0, %s7, %s5
  loop: start=0, step=1, limit=10
  $region2: #{transitions_forward.1} parent=0 // loop_pre_header
    _
  $region3: #{transitions_forward.1} parent=0 // loop_header
    %s10 = sphi 0, %s14
    %p11 = scmp.ge.s32.totalorder %s10, 10
    %s20 = sphi 0, %s22
    %s23 = sphi 0, %s20
    %s24 = sphi 0, %s23
    %s40 = sphi 0, %s24
    %s44 = sphi 0, %s44
    %s46 = sphi 0, %s44
    %s47 = sphi 0, %s46
    %s61 = sphi 0, %s47
    %s65 = sphi 0, %s65
    %s67 = sphi 0, %s65
    %s68 = sphi 0, %s67
    %s82 = sphi 0, %s68
    %s86 = sphi 0, %s86
    %s88 = sphi 0, %s86
    %s89 = sphi 0, %s88
    %s103 = sphi 0, %s89
    %s109 = sphi 0, %s111
    %s112 = sphi 0, %s109
    %s113 = sphi 0, %s112
    %s129 = sphi 0, %s113
  $region4: #{transitions_forward.1} parent=0 // loop_header_branch
    %13 = sbr.rel (%p11) target = $region8
  $region5: #{transitions_forward.1} parent=0 // loop_body
    %s15 = ssub.s32 %s10, 1
    %s16 = ssub.s32 %s10, 2
    %s17 = sadd.s32 %s10, 1
    %s18 = ssub.s32 %s10, %s17
    %p19 = scmp.eq.s32.totalorder %s18, 0
    %s21 = sadd.s32 %s20, 1
    %s22 = scalar_select %p19, %s20, %s21
    %p25 = pneg %p19
    %p26 = scmp.eq.s32.totalorder %s10, 7
    %p27 = por %p25, %p26
    %p28 = scmp.ne.s32.totalorder %s20, %s23
    %p29 = scmp.eq.s32.totalorder %s10, 0
    %p30 = por %p28, %p29
    %p31 = scmp.ne.s32.totalorder %s20, %s23
    %p32 = scmp.eq.s32.totalorder %s15, 7
    %p33 = por %p31, %p32
    %p34 = scmp.ne.s32.totalorder %s23, %s24
    %p35 = scmp.eq.s32.totalorder %s15, 0
    %p36 = por %p34, %p35
    %p37 = scmp.ne.s32.totalorder %s23, %s24
    %p38 = scmp.eq.s32.totalorder %s16, 7
    %p39 = por %p37, %p38
    %p41 = scmp.ne.s32.totalorder %s24, %s40
    %p42 = scmp.eq.s32.totalorder %s16, 0
    %p43 = por %p41, %p42
    %s45 = sadd.s32 %s44, 1
    %p48 = scmp.eq.s32.totalorder %s10, 7
    %p49 = scmp.ne.s32.totalorder %s44, %s46
    %p50 = scmp.eq.s32.totalorder %s10, 0
    %p51 = por %p49, %p50
    %p52 = scmp.ne.s32.totalorder %s44, %s46
    %p53 = scmp.eq.s32.totalorder %s15, 7
    %p54 = por %p52, %p53
    %p55 = scmp.ne.s32.totalorder %s46, %s47
    %p56 = scmp.eq.s32.totalorder %s15, 0
    %p57 = por %p55, %p56
    %p58 = scmp.ne.s32.totalorder %s46, %s47
    %p59 = scmp.eq.s32.totalorder %s16, 7
    %p60 = por %p58, %p59
    %p62 = scmp.ne.s32.totalorder %s47, %s61
    %p63 = scmp.eq.s32.totalorder %s16, 0
    %p64 = por %p62, %p63
    %s66 = sadd.s32 %s65, 1
    %p69 = scmp.eq.s32.totalorder %s10, 7
    %p70 = scmp.ne.s32.totalorder %s65, %s67
    %p71 = scmp.eq.s32.totalorder %s10, 0
    %p72 = por %p70, %p71
    %p73 = scmp.ne.s32.totalorder %s65, %s67
    %p74 = scmp.eq.s32.totalorder %s15, 7
    %p75 = por %p73, %p74
    %p76 = scmp.ne.s32.totalorder %s67, %s68
    %p77 = scmp.eq.s32.totalorder %s15, 0
    %p78 = por %p76, %p77
    %p79 = scmp.ne.s32.totalorder %s67, %s68
    %p80 = scmp.eq.s32.totalorder %s16, 7
    %p81 = por %p79, %p80
    %p83 = scmp.ne.s32.totalorder %s68, %s82
    %p84 = scmp.eq.s32.totalorder %s16, 0
    %p85 = por %p83, %p84
    %s87 = sadd.s32 %s86, 1
    %p90 = scmp.eq.s32.totalorder %s10, 7
    %p91 = scmp.ne.s32.totalorder %s86, %s88
    %p92 = scmp.eq.s32.totalorder %s10, 0
    %p93 = por %p91, %p92
    %p94 = scmp.ne.s32.totalorder %s86, %s88
    %p95 = scmp.eq.s32.totalorder %s15, 7
    %p96 = por %p94, %p95
    %p97 = scmp.ne.s32.totalorder %s88, %s89
    %p98 = scmp.eq.s32.totalorder %s15, 0
    %p99 = por %p97, %p98
    %p100 = scmp.ne.s32.totalorder %s88, %s89
    %p101 = scmp.eq.s32.totalorder %s16, 7
    %p102 = por %p100, %p101
    %p104 = scmp.ne.s32.totalorder %s89, %s103
    %p105 = scmp.eq.s32.totalorder %s16, 0
    %p106 = por %p104, %p105
    %s107 = ssub.s32 %s10, %s17
    %p108 = scmp.eq.s32.totalorder %s107, 0
    %s110 = sadd.s32 %s109, 1
    %s111 = scalar_select %p108, %s109, %s110
    %p114 = pneg %p108
    %p115 = scmp.eq.s32.totalorder %s10, 7
    %p116 = por %p114, %p115
    %p117 = scmp.ne.s32.totalorder %s109, %s112
    %p118 = scmp.eq.s32.totalorder %s10, 0
    %p119 = por %p117, %p118
    %p120 = scmp.ne.s32.totalorder %s109, %s112
    %p121 = scmp.eq.s32.totalorder %s15, 7
    %p122 = por %p120, %p121
    %p123 = scmp.ne.s32.totalorder %s112, %s113
    %p124 = scmp.eq.s32.totalorder %s15, 0
    %p125 = por %p123, %p124
    %p126 = scmp.ne.s32.totalorder %s112, %s113
    %p127 = scmp.eq.s32.totalorder %s16, 7
    %p128 = por %p126, %p127
    %p130 = scmp.ne.s32.totalorder %s113, %s129
    %p131 = scmp.eq.s32.totalorder %s16, 0
    %p132 = por %p130, %p131
    %p133 = scmp.le.s32.totalorder 1, %s10
    %p134 = scmp.lt.s32.totalorder %s10, 9
    %p135 = pnand %p133, %p134
    %p136 = pneg %p135
    // Predicated region
    $region9: #{transitions_forward.1} parent=5 // pred_check
      _
    $region10: #{transitions_forward.1} parent=5 // pred_check_branch
      %138 = sbr.rel (%p135) target = $region12
    $region11: #{transitions_forward.1} parent=5 // pred_region
      %s139 = ssub.s32 %s10, 1
      // Predicated region
      $region13: #{transitions_forward.1} parent=11 // pred_check
        %p140 = pneg %p57
      $region14: #{transitions_forward.1} parent=11 // pred_check_branch
        %142 = sbr.rel (%p140) target = $region16
      $region15: #{transitions_forward.1} parent=11 // pred_region
        _
      $region16: #{transitions_forward.1} parent=11 // pred_fallthru
        _
      // Predicated region
      $region17: #{transitions_forward.1} parent=11 // pred_check
        %p143 = pneg %p78
      $region18: #{transitions_forward.1} parent=11 // pred_check_branch
        %145 = sbr.rel (%p143) target = $region20
      $region19: #{transitions_forward.1} parent=11 // pred_region
        _
      $region20: #{transitions_forward.1} parent=11 // pred_fallthru
        _
      // Predicated region
      $region21: #{transitions_forward.1} parent=11 // pred_check
        %p146 = pneg %p99
      $region22: #{transitions_forward.1} parent=11 // pred_check_branch
        %148 = sbr.rel (%p146) target = $region24
      $region23: #{transitions_forward.1} parent=11 // pred_region
        _
      $region24: #{transitions_forward.1} parent=11 // pred_fallthru
        _
    $region12: #{transitions_forward.1} parent=5 // pred_fallthru
      _
    %p149 = scmp.lt.s32.totalorder %s10, 8
    // Predicated region
    $region25: #{transitions_forward.1} parent=5 // pred_check
      %p150 = pneg %p149
    $region26: #{transitions_forward.1} parent=5 // pred_check_branch
      %152 = sbr.rel (%p150) target = $region28
    $region27: #{transitions_forward.1} parent=5 // pred_region
      // Predicated region
      $region29: #{transitions_forward.1} parent=27 // pred_check
        %p153 = pneg %p30
      $region30: #{transitions_forward.1} parent=27 // pred_check_branch
        %155 = sbr.rel (%p153) target = $region32
      $region31: #{transitions_forward.1} parent=27 // pred_region
        %s156 = smul.u32 2, %s10
        %p157 = scmp.lt.s32.totalorder %s156, 15
        %s158 = scalar_select %p157, %s156, 15
        %s159 = smul.addr %s158, 8
        %s160 = scalar_lea.vmem %s0, %s159
        %s161 = smul.u32 2, %s10
      $region32: #{transitions_forward.1} parent=27 // pred_fallthru
        _
    $region28: #{transitions_forward.1} parent=5 // pred_fallthru
      _
    %p162 = scmp.le.s32.totalorder 1, %s10
    %p163 = scmp.lt.s32.totalorder %s10, 9
    %p164 = pnand %p162, %p163
    %p165 = pneg %p164
    // Predicated region
    $region33: #{transitions_forward.1} parent=5 // pred_check
      _
    $region34: #{transitions_forward.1} parent=5 // pred_check_branch
      %167 = sbr.rel (%p164) target = $region36
    $region35: #{transitions_forward.1} parent=5 // pred_region
      %s168 = ssub.s32 %s10, 1
      %s169 = smul.u32 2, %s15
      %p170 = scmp.lt.s32.totalorder %s169, 15
      %s171 = scalar_select %p170, %s169, 15
      %s172 = smul.addr %s171, 8
      %s173 = scalar_lea.vmem %s0, %s172
      %p174 = pneg %p36
      %p175 = pneg %p33
      %p176 = pneg %p57
      %p177 = pneg %p54
      %p178 = pneg %p78
      %p179 = pneg %p75
      %p180 = pneg %p99
      %p181 = pneg %p96
      %p182 = pneg %p125
      %p183 = pneg %p122
      %s184 = smul.u32 2, %s15
      %p185 = scmp.lt.s32.totalorder %s184, 15
      %s186 = scalar_select %p185, %s184, 15
      %s187 = smul.addr %s186, 8
      %s188 = scalar_lea.vmem %s4, %s187
      %s189 = smul.u32 2, %s15
      %p190 = scmp.lt.s32.totalorder %s189, 15
      %s191 = scalar_select %p190, %s189, 15
      %s192 = smul.addr %s191, 8
      %s193 = scalar_lea.vmem %s0, %s192
      %s194 = smul.u32 2, %s15
      %s195 = smul.u32 2, %s15
      %p196 = scmp.lt.s32.totalorder %s195, 15
      %s197 = scalar_select %p196, %s195, 15
      %s198 = smul.addr %s197, 8
      %s199 = scalar_lea.vmem %s4, %s198
      %s200 = smul.u32 2, %s15
      %v201 = vld [vmem:[%s1] sm:$0x1]
      %v202 = vld [vmem:[%s2] sm:$0x1]
      %v203 = vld [vmem:[%s193] sm:$0xff]
      %v204 = vld [vmem:[%s193 + $0x8] sm:$0xff]
      %v206 = vperm.slane %v201, 0
      %v208 = vmul.f32 %v203, %v206
      %v209 = vmul.f32 %v204, %v206
      %v211 = vperm.slane %v202, 0
      %v213 = vadd.f32 %v208, %v211
      %v214 = vadd.f32 %v209, %v211
      %vm215 = vcmp.gt.f32.partialorder %v213, 0.0
      %vm216 = vcmp.gt.f32.partialorder %v214, 0.0
      %v217 = vmul.f32 %v213, 0.01
      %v218 = vmul.f32 %v214, 0.01
      %v219 = vsel %vm215, %v213, %v217
      %v220 = vsel %vm216, %v214, %v218
      %221 = vrot.lane.b32.xlu0 %v206, 8
      %v222 = vpop.permute.xlu0 %221
      %v224 = vmul.f32 %v203, %v222
      %v225 = vmul.f32 %v204, %v222
      %226 = vrot.lane.b32.xlu0 %v211, 8
      %v227 = vpop.permute.xlu0 %226
      %v229 = vadd.f32 %v224, %v227
      %v230 = vadd.f32 %v225, %v227
      %vm231 = vcmp.gt.f32.partialorder %v229, 0.0
      %vm232 = vcmp.gt.f32.partialorder %v230, 0.0
      %v233 = vmul.f32 %v229, 0.01
      %v234 = vmul.f32 %v230, 0.01
      %v235 = vsel %vm231, %v229, %v233
      %v236 = vsel %vm232, %v230, %v234
      %239 = vrot.lane.b32.xlu0 %v235, 120
      %v240 = vpop.permute.xlu0 %239
      %241 = vrot.lane.b32.xlu0 %v236, 120
      %v242 = vpop.permute.xlu0 %241
      %v245 = vadd.f32 %v219, %v240
      %v246 = vadd.f32 %v220, %v242
      %247 = vrot.lane.b32.xlu0 %v206, 16
      %v248 = vpop.permute.xlu0 %247
      %v250 = vmul.f32 %v203, %v248
      %v251 = vmul.f32 %v204, %v248
      %252 = vrot.lane.b32.xlu0 %v211, 16
      %v253 = vpop.permute.xlu0 %252
      %v255 = vadd.f32 %v250, %v253
      %v256 = vadd.f32 %v251, %v253
      %vm257 = vcmp.gt.f32.partialorder %v255, 0.0
      %vm258 = vcmp.gt.f32.partialorder %v256, 0.0
      %v259 = vmul.f32 %v255, 0.01
      %v260 = vmul.f32 %v256, 0.01
      %v261 = vsel %vm257, %v255, %v259
      %v262 = vsel %vm258, %v256, %v260
      %265 = vrot.lane.b32.xlu0 %v261, 112
      %v266 = vpop.permute.xlu0 %265
      %267 = vrot.lane.b32.xlu0 %v262, 112
      %v268 = vpop.permute.xlu0 %267
      %v271 = vadd.f32 %v245, %v266
      %v272 = vadd.f32 %v246, %v268
      %273 = vrot.lane.b32.xlu0 %v206, 24
      %v274 = vpop.permute.xlu0 %273
      %v276 = vmul.f32 %v203, %v274
      %v277 = vmul.f32 %v204, %v274
      %278 = vrot.lane.b32.xlu0 %v211, 24
      %v279 = vpop.permute.xlu0 %278
      %v281 = vadd.f32 %v276, %v279
      %v282 = vadd.f32 %v277, %v279
      %vm283 = vcmp.gt.f32.partialorder %v281, 0.0
      %vm284 = vcmp.gt.f32.partialorder %v282, 0.0
      %v285 = vmul.f32 %v281, 0.01
      %v286 = vmul.f32 %v282, 0.01
      %v287 = vsel %vm283, %v281, %v285
      %v288 = vsel %vm284, %v282, %v286
      %291 = vrot.lane.b32.xlu0 %v287, 104
      %v292 = vpop.permute.xlu0 %291
      %293 = vrot.lane.b32.xlu0 %v288, 104
      %v294 = vpop.permute.xlu0 %293
      %v297 = vadd.f32 %v271, %v292
      %v298 = vadd.f32 %v272, %v294
      %299 = vrot.lane.b32.xlu0 %v206, 32
      %v300 = vpop.permute.xlu0 %299
      %v302 = vmul.f32 %v203, %v300
      %v303 = vmul.f32 %v204, %v300
      %304 = vrot.lane.b32.xlu0 %v211, 32
      %v305 = vpop.permute.xlu0 %304
      %v307 = vadd.f32 %v302, %v305
      %v308 = vadd.f32 %v303, %v305
      %vm309 = vcmp.gt.f32.partialorder %v307, 0.0
      %vm310 = vcmp.gt.f32.partialorder %v308, 0.0
      %v311 = vmul.f32 %v307, 0.01
      %v312 = vmul.f32 %v308, 0.01
      %v313 = vsel %vm309, %v307, %v311
      %v314 = vsel %vm310, %v308, %v312
      %317 = vrot.lane.b32.xlu0 %v313, 96
      %v318 = vpop.permute.xlu0 %317
      %319 = vrot.lane.b32.xlu0 %v314, 96
      %v320 = vpop.permute.xlu0 %319
      %v323 = vadd.f32 %v297, %v318
      %v324 = vadd.f32 %v298, %v320
      %325 = vrot.lane.b32.xlu0 %v206, 40
      %v326 = vpop.permute.xlu0 %325
      %v328 = vmul.f32 %v203, %v326
      %v329 = vmul.f32 %v204, %v326
      %330 = vrot.lane.b32.xlu0 %v211, 40
      %v331 = vpop.permute.xlu0 %330
      %v333 = vadd.f32 %v328, %v331
      %v334 = vadd.f32 %v329, %v331
      %vm335 = vcmp.gt.f32.partialorder %v333, 0.0
      %vm336 = vcmp.gt.f32.partialorder %v334, 0.0
      %v337 = vmul.f32 %v333, 0.01
      %v338 = vmul.f32 %v334, 0.01
      %v339 = vsel %vm335, %v333, %v337
      %v340 = vsel %vm336, %v334, %v338
      %343 = vrot.lane.b32.xlu0 %v339, 88
      %v344 = vpop.permute.xlu0 %343
      %345 = vrot.lane.b32.xlu0 %v340, 88
      %v346 = vpop.permute.xlu0 %345
      %v349 = vadd.f32 %v323, %v344
      %v350 = vadd.f32 %v324, %v346
      %351 = vrot.lane.b32.xlu0 %v206, 48
      %v352 = vpop.permute.xlu0 %351
      %v354 = vmul.f32 %v203, %v352
      %v355 = vmul.f32 %v204, %v352
      %356 = vrot.lane.b32.xlu0 %v211, 48
      %v357 = vpop.permute.xlu0 %356
      %v359 = vadd.f32 %v354, %v357
      %v360 = vadd.f32 %v355, %v357
      %vm361 = vcmp.gt.f32.partialorder %v359, 0.0
      %vm362 = vcmp.gt.f32.partialorder %v360, 0.0
      %v363 = vmul.f32 %v359, 0.01
      %v364 = vmul.f32 %v360, 0.01
      %v365 = vsel %vm361, %v359, %v363
      %v366 = vsel %vm362, %v360, %v364
      %369 = vrot.lane.b32.xlu0 %v365, 80
      %v370 = vpop.permute.xlu0 %369
      %371 = vrot.lane.b32.xlu0 %v366, 80
      %v372 = vpop.permute.xlu0 %371
      %v375 = vadd.f32 %v349, %v370
      %v376 = vadd.f32 %v350, %v372
      %377 = vrot.lane.b32.xlu0 %v206, 56
      %v378 = vpop.permute.xlu0 %377
      %v380 = vmul.f32 %v203, %v378
      %v381 = vmul.f32 %v204, %v378
      %382 = vrot.lane.b32.xlu0 %v211, 56
      %v383 = vpop.permute.xlu0 %382
      %v385 = vadd.f32 %v380, %v383
      %v386 = vadd.f32 %v381, %v383
      %vm387 = vcmp.gt.f32.partialorder %v385, 0.0
      %vm388 = vcmp.gt.f32.partialorder %v386, 0.0
      %v389 = vmul.f32 %v385, 0.01
      %v390 = vmul.f32 %v386, 0.01
      %v391 = vsel %vm387, %v385, %v389
      %v392 = vsel %vm388, %v386, %v390
      %395 = vrot.lane.b32.xlu0 %v391, 72
      %v396 = vpop.permute.xlu0 %395
      %397 = vrot.lane.b32.xlu0 %v392, 72
      %v398 = vpop.permute.xlu0 %397
      %v401 = vadd.f32 %v375, %v396
      %v402 = vadd.f32 %v376, %v398
      %v403 = vld [vmem:[%s3] sm:$0xff]
      %vm404 = vcmask 64512
      %v406 = vsel %vm404, %v401, 0
      %v409 = vsel %vm404, %v402, 0
      %411 = vmatpush.msra.mxu0 0.0
      %412 = vmatpush.msra.mxu0 0.0
      %413 = vmatpush.msra.mxu0 0.0
      %414 = vmatpush.msra.mxu0 0.0
      %415 = vmatpush.msra.mxu0 0.0
      %416 = vmatpush.msra.mxu0 0.0
      %417 = vmatpush.msra.mxu0 0.0
      %418 = vmatpush.msra.mxu0 0.0
      %419 = vmatpush.msra.mxu0 0.0
      %420 = vmatpush.msra.mxu0 0.0
      %421 = vmatpush.msra.mxu0 0.0
      %422 = vmatpush.msra.mxu0 0.0
      %423 = vmatpush.msra.mxu0 0.0
      %424 = vmatpush.msra.mxu0 0.0
      %425 = vmatpush.msra.mxu0 0.0
      %426 = vmatpush.msra.mxu0 %v403
      %427 = vmatmul.f32.gmra.mxu0 %v406
      %v428 = vpop.f32.mrf.mxu0
      %v429 = vadd.f32 0.0, %v428
      %430 = vmatmul.f32.gmra.mxu0 %v409
      %v431 = vpop.f32.mrf.mxu0
      %v432 = vadd.f32 0.0, %v431
      %433 = vdwg.mxu0
      %vm434 = vcmask 31744
      %435 = vst.msk [vmem:[%s199] sm:$0xff] %vm434, %v429
      %436 = vst.msk [vmem:[%s199 + $0x8] sm:$0xff] %vm434, %v432
      %s437 = smul.u32 2, %s15
      %p438 = scmp.lt.s32.totalorder %s437, 15
      %s439 = scalar_select %p438, %s437, 15
      %s440 = smul.addr %s439, 8
      %s441 = scalar_lea.vmem %s4, %s440
      // Predicated region
      $region37: #{transitions_forward.1} parent=35 // pred_check
        %p442 = pneg %p122
      $region38: #{transitions_forward.1} parent=35 // pred_check_branch
        %444 = sbr.rel (%p442) target = $region40
      $region39: #{transitions_forward.1} parent=35 // pred_region
        %s445 = smul.u32 2, %s15
      $region40: #{transitions_forward.1} parent=35 // pred_fallthru
        _
    $region36: #{transitions_forward.1} parent=5 // pred_fallthru
      _
    %p446 = scmp.le.s32.totalorder 2, %s10
    // Predicated region
    $region41: #{transitions_forward.1} parent=5 // pred_check
      %p447 = pneg %p446
    $region42: #{transitions_forward.1} parent=5 // pred_check_branch
      %449 = sbr.rel (%p447) target = $region44
    $region43: #{transitions_forward.1} parent=5 // pred_region
      %s450 = ssub.s32 %s10, 2
      // Predicated region
      $region45: #{transitions_forward.1} parent=43 // pred_check
        %p451 = pneg %p128
      $region46: #{transitions_forward.1} parent=43 // pred_check_branch
        %453 = sbr.rel (%p451) target = $region48
      $region47: #{transitions_forward.1} parent=43 // pred_region
        %s454 = smul.u32 2, %s16
        %p455 = scmp.lt.s32.totalorder %s454, 15
        %s456 = scalar_select %p455, %s454, 15
        %s457 = smul.addr %s456, 8
        %s458 = scalar_lea.vmem %s4, %s457
      $region48: #{transitions_forward.1} parent=43 // pred_fallthru
        _
    $region44: #{transitions_forward.1} parent=5 // pred_fallthru
      _
  $region6: #{transitions_forward.1} parent=0 // loop_footer
    %s14 = sadd.s32 1, %s10
  $region7: #{transitions_forward.1} parent=0 // loop_footer_branch
    %9 = sbr.rel target = $region3
  $region8: #{transitions_forward.1} parent=0 // loop_exit
    _

</llo_original>
